<compile_context>
chip_gen: v7x
topology: tpu7x:2x2x1
jax: 0.10.0
libtpu: 0.0.40
codegen_flags: <defaults>
</compile_context>

<pallas_src>
import functools

import jax
import jax.numpy as jnp
from jax.experimental import pallas as pl
from jax.experimental.pallas import tpu as pltpu


def _round_up(x, m):
    return ((x + m - 1) // m) * m


@functools.lru_cache(maxsize=1)
def _vmem_capacity_bytes():
    """Per-TensorCore VMEM capacity; conservative fallback if the query fails."""
    try:
        info = pltpu.get_tpu_info()
        cap = int(getattr(info, "vmem_capacity_bytes", 0))
        if cap > 0:
            return cap
    except Exception:
        pass
    return 64 * 1024 * 1024  # v7x physical VMEM per TC (smallest of current gens)


def _select_tiles(tm, in_pad, out_pad, n_wstreams, budget_bytes):
    """Largest (tk, tn) whose double-buffered f32 footprint fits the VMEM budget."""
    best = None  # (score, tk, tn, footprint)
    for tk in (2048, 1024, 512, 256, 128):
        if tk > in_pad or in_pad % tk:
            continue
        for tn in (1024, 512, 256, 128):
            if tn > out_pad or out_pad % tn:
                continue
            fp = 2 * (tm * tk + n_wstreams * tk * tn + tm * tn + tn) * 4
            if fp > budget_bytes:
                continue
            score = (tk * tn, tn)  # prefer bigger tiles; tie-break lane-dense output
            if best is None or score > best[0]:
                best = (score, tk, tn, fp)
    if best is None:  # always fits in practice; defensive fallback
        tk, tn = min(128, in_pad), min(128, out_pad)
        fp = 2 * (tm * tk + n_wstreams * tk * tn + tm * tn + tn) * 4
        return tk, tn, fp
    _, tk, tn, fp = best
    return tk, tn, fp


def _zero_output_kernel(*refs, scaling, subtract_w0):
    """One K-step of  out = scaling * (x @ dW) + db  with dW = W - W0 (or precomputed)."""
    if subtract_w0:
        x_ref, w_ref, w0_ref, db_ref, o_ref = refs
        dw = w_ref[...] - w0_ref[...]          # VPU subtract on the weight tile
    else:
        x_ref, dw_ref, db_ref, o_ref = refs
        dw = dw_ref[...]

    k = pl.program_id(2)

    @pl.when(k == 0)
    def _init():
        o_ref[...] = jnp.zeros_like(o_ref)

    # f32 output block stays resident across the K axis -> accumulate in place.
    o_ref[...] += jnp.dot(x_ref[...], dw, preferred_element_type=jnp.float32)

    @pl.when(k == pl.num_programs(2) - 1)
    def _finalize():
        acc = o_ref[...]
        if scaling != 1.0:
            acc = scaling * acc
        o_ref[...] = acc + db_ref[...]          # db already carries the scaling


def _zero_output_pallas(x, w_list, db, scaling):
    """Shared tiled pallas_call; w_list is [W, W0] (one-shot) or [dW] (reuse path)."""
    B, IN = x.shape
    OUT = w_list[0].shape[1]

    if B <= 256:
        tm = _round_up(max(B, 8), 8)
        B_pad = tm
    else:
        tm = 256
        B_pad = _round_up(B, tm)

    IN_pad = _round_up(IN, 128)
    OUT_pad = _round_up(OUT, 128)

    cap = _vmem_capacity_bytes()
    budget = cap // 2                     # leave headroom for compiler scratch
    n_w = len(w_list)
    tk, tn, footprint = _select_tiles(tm, IN_pad, OUT_pad, n_w, budget)

    # Guarantee >=2 tiles along a parallel axis so v7x's 2 TensorCores both engage
    # (neutral on single-TC v5e/v6e).
    if (B_pad // tm) * (OUT_pad // tn) < 2 and tn >= 256 and OUT_pad % (tn // 2) == 0:
        tn //= 2

    # Pad only when a dim is actually ragged (avoids an extra HBM read+write pass
    # over the big weight operands when shapes are already aligned).
    # TODO(synk): for very large ragged IN/OUT, in-kernel masking would avoid the
    # padded weight copies entirely; padding is used here for robustness.
    def pad2(a, rows, cols):
        pr, pc = rows - a.shape[0], cols - a.shape[1]
        return jnp.pad(a, ((0, pr), (0, pc))) if (pr or pc) else a

    x_p = pad2(x, B_pad, IN_pad)
    w_p = [pad2(wi, IN_pad, OUT_pad) for wi in w_list]
    db_p = pad2(db, 1, OUT_pad)

    grid = (B_pad // tm, OUT_pad // tn, IN_pad // tk)

    kernel = functools.partial(_zero_output_kernel,
                               scaling=float(scaling),
                               subtract_w0=(n_w == 2))

    in_specs = [pl.BlockSpec((tm, tk), lambda i, j, k: (i, k))]          # x
    in_specs += [pl.BlockSpec((tk, tn), lambda i, j, k: (k, j))          # W (, W0 / dW)
                 for _ in w_p]
    in_specs += [pl.BlockSpec((1, tn), lambda i, j, k: (0, j))]          # db

    vmem_limit = int(min(cap, max(footprint + (32 << 20), 32 << 20)))

    out_p = pl.pallas_call(
        kernel,
        out_shape=jax.ShapeDtypeStruct((B_pad, OUT_pad), jnp.float32),
        grid_spec=pltpu.PrefetchScalarGridSpec(
            num_scalar_prefetch=0,
            grid=grid,
            in_specs=in_specs,
            out_specs=pl.BlockSpec((tm, tn), lambda i, j, k: (i, j)),
        ),
        compiler_params=pltpu.CompilerParams(
            dimension_semantics=("parallel", "parallel", "arbitrary"),
            vmem_limit_bytes=vmem_limit),
    )(x_p, *w_p, db_p)

    if B_pad != B or OUT_pad != OUT:
        out_p = out_p[:B, :OUT]
    return out_p


@functools.partial(jax.jit, static_argnames=("scaling", "force_pallas"))
def zero_output_forward(x, w, b, w0, b0, *, scaling=1.0, force_pallas=False):
    """ZeroOutput.forward: scaling * ((x @ W + b) - (x @ W0 + b0)).

    x  : [B, IN] f32;  w, w0 : [IN, OUT] f32 (PyTorch weight.T);  b, b0 : [OUT] or [1, OUT].
    """
    B, IN = x.shape
    OUT = w.shape[1]
    db = (scaling * (b.reshape(1, -1) - b0.reshape(1, -1))).astype(jnp.float32)

    # Small-shape fast path: one fused XLA op beats a padded pallas_call outright.
    if not force_pallas and (B <= 1024 and IN * OUT <= 512 * 512):
        return scaling * (x @ (w - w0)) + db

    return _zero_output_pallas(x, [w, w0], db, scaling)


def precompute_zero_output_deltas(w, b, w0, b0, scaling=1.0):
    """When (W, W0) are reused across many calls, materialize the scaled deltas once.
    Halves the dominant HBM weight stream of the kernel (single dW instead of W + W0).
    Note: the *difference* is formed in f32 (casting W and W0 separately would
    reintroduce catastrophic cancellation)."""
    dw = (scaling * (w - w0)).astype(jnp.float32)
    db = (scaling * (b.reshape(1, -1) - b0.reshape(1, -1))).astype(jnp.float32)
    return dw, db


@functools.partial(jax.jit, static_argnames=("force_pallas",))
def zero_output_forward_from_deltas(x, dw, db, *, force_pallas=False):
    """Forward using precomputed scaled deltas: out = x @ dW + db."""
    B, IN = x.shape
    OUT = dw.shape[1]
    db = db.reshape(1, -1)
    if not force_pallas and (B <= 1024 and IN * OUT <= 512 * 512):
        return x @ dw + db
    return _zero_output_pallas(x, [dw], db, 1.0)


# TODO(synk): get_gradient / ntk_features rely on torch autograd over parameters;
# only the forward pass is implemented here.


if __name__ == "__main__":
    B, IN, OUT = 8, 32, 32
    scaling = 0.5

    key = jax.random.PRNGKey(0)
    k_x, k_w, k_b, k_d = jax.random.split(key, 4)

    x = jax.random.normal(k_x, (B, IN), dtype=jnp.float32)

    # init_module params (deepcopy at construction), PyTorch Linear default init.
    bound = 1.0 / float(IN) ** 0.5
    w0_t = jax.random.uniform(k_w, (IN, OUT), jnp.float32, -bound, bound)   # [in, out]
    b0 = jax.random.uniform(k_b, (1, OUT), jnp.float32, -bound, bound)

    # "current" params: init + small perturbation (simulating training).
    delta = 0.01 * jax.random.normal(k_d, (IN, OUT), dtype=jnp.float32)
    w_t = w0_t + delta
    b = b0 + 0.01

    # Pure-JAX reference (original, unfused formulation).
    ref = scaling * ((x @ w_t + b) - (x @ w0_t + b0))

    # 1) Pallas kernel path (forced so the kernel is exercised at this small size).
    out_k = jax.block_until_ready(
        zero_output_forward(x, w_t, b, w0_t, b0, scaling=scaling, force_pallas=True))
    assert out_k.shape == (B, OUT)
    assert jnp.allclose(out_k, ref, atol=1e-5, rtol=1e-5)

    # 2) Default dispatch (small-shape XLA fast path).
    out_f = jax.block_until_ready(
        zero_output_forward(x, w_t, b, w0_t, b0, scaling=scaling))
    assert jnp.allclose(out_f, ref, atol=1e-5, rtol=1e-5)

    # 3) Weight-reuse path: precomputed scaled deltas, single-weight-stream kernel.
    dw, db = precompute_zero_output_deltas(w_t, b, w0_t, b0, scaling=scaling)
    out_d = jax.block_until_ready(
        zero_output_forward_from_deltas(x, dw, db, force_pallas=True))
    assert jnp.allclose(out_d, ref, atol=1e-5, rtol=1e-5)

    # 4) At construction (module == init_module) the output is exactly zero.
    out0 = jax.block_until_ready(
        zero_output_forward(x, w0_t, b0, w0_t, b0, scaling=scaling, force_pallas=True))
    assert jnp.allclose(out0, jnp.zeros((B, OUT), jnp.float32))

    print("KERNEL_OK")
</pallas_src>

<mosaic_0001>
module attributes {stable_mosaic.version = 11 : i64} {
  func.func @_zero_output_kernel(%arg0: i32, %arg1: i32, %arg2: i32, %arg3: memref<8x128xf32, #tpu.memory_space<vmem>>, %arg4: memref<128x128xf32, #tpu.memory_space<vmem>>, %arg5: memref<128x128xf32, #tpu.memory_space<vmem>>, %arg6: memref<1x128xf32, #tpu.memory_space<vmem>>, %arg7: memref<8x128xf32, #tpu.memory_space<vmem>>) attributes {dimension_semantics = [#tpu.dimension_semantics<parallel>, #tpu.dimension_semantics<parallel>, #tpu.dimension_semantics<arbitrary>], iteration_bounds = array<i64: 1, 1, 1>, scalar_prefetch = 0 : i64, scratch_operands = 0 : i64, tpu.core_type = #tpu.core_type<tc>, window_params = [{transform_indices = @transform_0, window_bounds = array<i64: 8, 128>}, {transform_indices = @transform_1, window_bounds = array<i64: 128, 128>}, {transform_indices = @transform_2, window_bounds = array<i64: 128, 128>}, {transform_indices = @transform_3, window_bounds = array<i64: 1, 128>}, {transform_indices = @transform_4, window_bounds = array<i64: 8, 128>}]} {
    %c0 = arith.constant 0 : index
    %c0_0 = arith.constant 0 : index
    %0 = vector.load %arg4[%c0, %c0_0] : memref<128x128xf32, #tpu.memory_space<vmem>>, vector<128x128xf32>
    %c0_1 = arith.constant 0 : index
    %c0_2 = arith.constant 0 : index
    %1 = vector.load %arg5[%c0_1, %c0_2] : memref<128x128xf32, #tpu.memory_space<vmem>>, vector<128x128xf32>
    %2 = arith.subf %0, %1 : vector<128x128xf32>
    %c0_i32 = arith.constant 0 : i32
    %3 = arith.cmpi eq, %arg2, %c0_i32 : i32
    %4 = arith.extui %3 : i1 to i32
    %c0_i32_3 = arith.constant 0 : i32
    %5 = arith.cmpi ne, %4, %c0_i32_3 : i32
    scf.if %5 {
      %cst_12 = arith.constant 0.000000e+00 : f32
      %14 = vector.broadcast %cst_12 : f32 to vector<8x128xf32>
      %c0_13 = arith.constant 0 : index
      %c0_14 = arith.constant 0 : index
      %15 = vector.load %arg7[%c0_13, %c0_14] : memref<8x128xf32, #tpu.memory_space<vmem>>, vector<8x128xf32>
      tpu.vector_store %arg7[%c0_13, %c0_14], %14 {strides = array<i32>} : memref<8x128xf32, #tpu.memory_space<vmem>>, vector<8x128xf32>,
    } else {
    }
    %c0_4 = arith.constant 0 : index
    %c0_5 = arith.constant 0 : index
    %6 = vector.load %arg7[%c0_4, %c0_5] : memref<8x128xf32, #tpu.memory_space<vmem>>, vector<8x128xf32>
    %c0_6 = arith.constant 0 : index
    %c0_7 = arith.constant 0 : index
    %7 = vector.load %arg3[%c0_6, %c0_7] : memref<8x128xf32, #tpu.memory_space<vmem>>, vector<8x128xf32>
    %cst = arith.constant dense<0.000000e+00> : vector<8x128xf32>
    %8 = tpu.matmul %7, %2, %cst {dimension_numbers = #tpu.dot_dimension_numbers<[1], [0], [0], [1], [0, 0, 1, 1], [], []>} : vector<8x128xf32>, vector<128x128xf32>, vector<8x128xf32> -> vector<8x128xf32>
    %9 = arith.addf %6, %8 : vector<8x128xf32>
    %c0_8 = arith.constant 0 : index
    %c0_9 = arith.constant 0 : index
    %10 = vector.load %arg7[%c0_8, %c0_9] : memref<8x128xf32, #tpu.memory_space<vmem>>, vector<8x128xf32>
    tpu.vector_store %arg7[%c0_8, %c0_9], %9 {strides = array<i32>} : memref<8x128xf32, #tpu.memory_space<vmem>>, vector<8x128xf32>,
    %c0_i32_10 = arith.constant 0 : i32
    %11 = arith.cmpi eq, %arg2, %c0_i32_10 : i32
    %12 = arith.extui %11 : i1 to i32
    %c0_i32_11 = arith.constant 0 : i32
    %13 = arith.cmpi ne, %12, %c0_i32_11 : i32
    scf.if %13 {
      %c0_12 = arith.constant 0 : index
      %c0_13 = arith.constant 0 : index
      %14 = vector.load %arg7[%c0_12, %c0_13] : memref<8x128xf32, #tpu.memory_space<vmem>>, vector<8x128xf32>
      %cst_14 = arith.constant 5.000000e-01 : f32
      %15 = vector.broadcast %cst_14 : f32 to vector<8x128xf32>
      %16 = arith.mulf %15, %14 : vector<8x128xf32>
      %c0_15 = arith.constant 0 : index
      %c0_16 = arith.constant 0 : index
      %17 = vector.load %arg6[%c0_15, %c0_16] : memref<1x128xf32, #tpu.memory_space<vmem>>, vector<1x128xf32>
      %18 = vector.broadcast %17 : vector<1x128xf32> to vector<8x128xf32>
      %19 = arith.addf %16, %18 : vector<8x128xf32>
      %c0_17 = arith.constant 0 : index
      %c0_18 = arith.constant 0 : index
      %20 = vector.load %arg7[%c0_17, %c0_18] : memref<8x128xf32, #tpu.memory_space<vmem>>, vector<8x128xf32>
      tpu.vector_store %arg7[%c0_17, %c0_18], %19 {strides = array<i32>} : memref<8x128xf32, #tpu.memory_space<vmem>>, vector<8x128xf32>,
    } else {
    }
    return
  }
  func.func @transform_0(%arg0: i32, %arg1: i32, %arg2: i32) -> (i32, i32) {
    %c0_i32 = arith.constant 0 : i32
    return %arg0, %arg2 : i32, i32
  }
  func.func @transform_1(%arg0: i32, %arg1: i32, %arg2: i32) -> (i32, i32) {
    %c0_i32 = arith.constant 0 : i32
    return %arg2, %arg1 : i32, i32
  }
  func.func @transform_2(%arg0: i32, %arg1: i32, %arg2: i32) -> (i32, i32) {
    %c0_i32 = arith.constant 0 : i32
    return %arg2, %arg1 : i32, i32
  }
  func.func @transform_3(%arg0: i32, %arg1: i32, %arg2: i32) -> (i32, i32) {
    %c0_i32 = arith.constant 0 : i32
    %c0_i32_0 = arith.constant 0 : i32
    return %c0_i32, %arg1 : i32, i32
  }
  func.func @transform_4(%arg0: i32, %arg1: i32, %arg2: i32) -> (i32, i32) {
    %c0_i32 = arith.constant 0 : i32
    return %arg0, %arg1 : i32, i32
  }
}

</mosaic_0001>

<llo_original>
// kernel: zero_output_forward.1
$region0: #{zero_output_forward.1}
  #allocation0 [shape = 'u32[]', space=smem, size = 0x4, offset = 0x4, fixed_abs, tag = 'smem constant byte address 0x4 - core index']
  #allocation1 [shape = 'u32[144,128]{1,0:T(1,128)}', space=vmem, size = 0x12000, scoped, tag = 'internal scratch']
  %s0 = inlined_call_operand.vmem [shape: f32[8,128], index: 0, kind: input, shape index: {}]
  %s1 = inlined_call_operand.vmem [shape: f32[128,128], index: 1, kind: input, shape index: {}]
  %s2 = inlined_call_operand.vmem [shape: f32[128,128], index: 2, kind: input, shape index: {}]
  %s3 = inlined_call_operand.vmem [shape: f32[1,128], index: 3, kind: input, shape index: {}]
  %s4 = inlined_call_operand.hbm [shape: f32[8,128], index: 4, kind: output, shape index: {}]
  %s5 = sld [smem:[#allocation0]]
  $region34: #{zero_output_forward.1} parent=0
    _
  %s7 = ssub.s32 1, %s5
  %s8 = scalar_select 0, %s7, %s5
  $region1: #{zero_output_forward.1} parent=0
    #allocation2 [shape = 'u8[4096]{0}', space=vmem, size = 0x1000, scoped, tag = 'output window, operand 0, single buffered']
    #allocation3 [shape = 's32[1]{0}', space=sflag, size = 0x4, scoped, tag = 'scoped memory for zero_output_forward.1']
    %9 = vsyncpa [#allocation3], 0
    // Predicated region
    $region2: #{zero_output_forward.1} parent=1 // pred_check
      _
    $region3: #{zero_output_forward.1} parent=1 // pred_check_branch
      %11 = sbr.rel (0) target = $region5
    $region4: #{zero_output_forward.1} parent=1 // pred_region
      _
    $region5: #{zero_output_forward.1} parent=1 // pred_fallthru
      _
    // Predicated region
    $region6: #{zero_output_forward.1} parent=1 // pred_check
      _
    $region7: #{zero_output_forward.1} parent=1 // pred_check_branch
      %13 = sbr.rel (0) target = $region9
    $region8: #{zero_output_forward.1} parent=1 // pred_region
      _
    $region9: #{zero_output_forward.1} parent=1 // pred_fallthru
      _
    // Predicated region
    $region10: #{zero_output_forward.1} parent=1 // pred_check
      _
    $region11: #{zero_output_forward.1} parent=1 // pred_check_branch
      %15 = sbr.rel (0) target = $region13
    $region12: #{zero_output_forward.1} parent=1 // pred_region
      _
    $region13: #{zero_output_forward.1} parent=1 // pred_fallthru
      _
    // Predicated region
    $region14: #{zero_output_forward.1} parent=1 // pred_check
      _
    $region15: #{zero_output_forward.1} parent=1 // pred_check_branch
      %17 = sbr.rel (0) target = $region17
    $region16: #{zero_output_forward.1} parent=1 // pred_region
      _
    $region17: #{zero_output_forward.1} parent=1 // pred_fallthru
      _
    %v18 = vld [vmem:[%s1] sm:$0xff]
    %v19 = vld [vmem:[%s1 + $0x8] sm:$0xff]
    %v20 = vld [vmem:[%s1 + $0x10] sm:$0xff]
    %v21 = vld [vmem:[%s1 + $0x18] sm:$0xff]
    %v22 = vld [vmem:[%s1 + $0x20] sm:$0xff]
    %v23 = vld [vmem:[%s1 + $0x28] sm:$0xff]
    %v24 = vld [vmem:[%s1 + $0x30] sm:$0xff]
    %v25 = vld [vmem:[%s1 + $0x38] sm:$0xff]
    %v26 = vld [vmem:[%s1 + $0x40] sm:$0xff]
    %v27 = vld [vmem:[%s1 + $0x48] sm:$0xff]
    %v28 = vld [vmem:[%s1 + $0x50] sm:$0xff]
    %v29 = vld [vmem:[%s1 + $0x58] sm:$0xff]
    %v30 = vld [vmem:[%s1 + $0x60] sm:$0xff]
    %v31 = vld [vmem:[%s1 + $0x68] sm:$0xff]
    %v32 = vld [vmem:[%s1 + $0x70] sm:$0xff]
    %v33 = vld [vmem:[%s1 + $0x78] sm:$0xff]
    %v34 = vld [vmem:[%s2] sm:$0xff]
    %v35 = vld [vmem:[%s2 + $0x8] sm:$0xff]
    %v36 = vld [vmem:[%s2 + $0x10] sm:$0xff]
    %v37 = vld [vmem:[%s2 + $0x18] sm:$0xff]
    %v38 = vld [vmem:[%s2 + $0x20] sm:$0xff]
    %v39 = vld [vmem:[%s2 + $0x28] sm:$0xff]
    %v40 = vld [vmem:[%s2 + $0x30] sm:$0xff]
    %v41 = vld [vmem:[%s2 + $0x38] sm:$0xff]
    %v42 = vld [vmem:[%s2 + $0x40] sm:$0xff]
    %v43 = vld [vmem:[%s2 + $0x48] sm:$0xff]
    %v44 = vld [vmem:[%s2 + $0x50] sm:$0xff]
    %v45 = vld [vmem:[%s2 + $0x58] sm:$0xff]
    %v46 = vld [vmem:[%s2 + $0x60] sm:$0xff]
    %v47 = vld [vmem:[%s2 + $0x68] sm:$0xff]
    %v48 = vld [vmem:[%s2 + $0x70] sm:$0xff]
    %v49 = vld [vmem:[%s2 + $0x78] sm:$0xff]
    %v50 = vsub.f32 %v18, %v34
    %v51 = vsub.f32 %v19, %v35
    %v52 = vsub.f32 %v20, %v36
    %v53 = vsub.f32 %v21, %v37
    %v54 = vsub.f32 %v22, %v38
    %v55 = vsub.f32 %v23, %v39
    %v56 = vsub.f32 %v24, %v40
    %v57 = vsub.f32 %v25, %v41
    %v58 = vsub.f32 %v26, %v42
    %v59 = vsub.f32 %v27, %v43
    %v60 = vsub.f32 %v28, %v44
    %v61 = vsub.f32 %v29, %v45
    %v62 = vsub.f32 %v30, %v46
    %v63 = vsub.f32 %v31, %v47
    %v64 = vsub.f32 %v32, %v48
    %v65 = vsub.f32 %v33, %v49
    %p66 = scmp.eq.s32.totalorder 0, 0
    // Predicated region
    $region18: #{zero_output_forward.1} parent=1 // pred_check
      %p67 = pneg %p66
    $region19: #{zero_output_forward.1} parent=1 // pred_check_branch
      %69 = sbr.rel (%p67) target = $region21
    $region20: #{zero_output_forward.1} parent=1 // pred_region
      %70 = vst [vmem:[#allocation2] sm:$0xff] 0.0
    $region21: #{zero_output_forward.1} parent=1 // pred_fallthru
      _
    %v71 = vld [vmem:[#allocation2] sm:$0xff]
    %v72 = vld [vmem:[%s0] sm:$0xff]
    %73 = vmatprep.subr.mxu0 0.0
    %74 = vmatpush1.msra.mxu0 %v50
    %75 = vmatprep.subr.mxu0 0.0
    %76 = vmatpush1.msra.mxu0 %v51
    %77 = vmatprep.subr.mxu0 0.0
    %78 = vmatpush1.msra.mxu0 %v52
    %79 = vmatprep.subr.mxu0 0.0
    %80 = vmatpush1.msra.mxu0 %v53
    %81 = vmatprep.subr.mxu0 0.0
    %82 = vmatpush1.msra.mxu0 %v54
    %83 = vmatprep.subr.mxu0 0.0
    %84 = vmatpush1.msra.mxu0 %v55
    %85 = vmatprep.subr.mxu0 0.0
    %86 = vmatpush1.msra.mxu0 %v56
    %87 = vmatprep.subr.mxu0 0.0
    %88 = vmatpush1.msra.mxu0 %v57
    %89 = vmatprep.subr.mxu0 0.0
    %90 = vmatpush1.msra.mxu0 %v58
    %91 = vmatprep.subr.mxu0 0.0
    %92 = vmatpush1.msra.mxu0 %v59
    %93 = vmatprep.subr.mxu0 0.0
    %94 = vmatpush1.msra.mxu0 %v60
    %95 = vmatprep.subr.mxu0 0.0
    %96 = vmatpush1.msra.mxu0 %v61
    %97 = vmatprep.subr.mxu0 0.0
    %98 = vmatpush1.msra.mxu0 %v62
    %99 = vmatprep.subr.mxu0 0.0
    %100 = vmatpush1.msra.mxu0 %v63
    %101 = vmatprep.subr.mxu0 0.0
    %102 = vmatpush1.msra.mxu0 %v64
    %103 = vmatprep.subr.mxu0 0.0
    %104 = vmatpush1.msra.mxu0 %v65
    %105 = vmatprep.subr.mxu0 0.0
    %106 = vmatpush1.msra.mxu0 0.0
    %107 = vmatprep.subr.mxu0 0.0
    %108 = vmatpush1.msra.mxu0 0.0
    %109 = vmatprep.subr.mxu0 0.0
    %110 = vmatpush1.msra.mxu0 0.0
    %111 = vmatprep.subr.mxu0 0.0
    %112 = vmatpush1.msra.mxu0 0.0
    %113 = vmatprep.subr.mxu0 0.0
    %114 = vmatpush1.msra.mxu0 0.0
    %115 = vmatprep.subr.mxu0 0.0
    %116 = vmatpush1.msra.mxu0 0.0
    %117 = vmatprep.subr.mxu0 0.0
    %118 = vmatpush1.msra.mxu0 0.0
    %119 = vmatprep.subr.mxu0 0.0
    %120 = vmatpush1.msra.mxu0 0.0
    %121 = vmatprep.subr.mxu0 0.0
    %122 = vmatpush1.msra.mxu0 0.0
    %123 = vmatprep.subr.mxu0 0.0
    %124 = vmatpush1.msra.mxu0 0.0
    %125 = vmatprep.subr.mxu0 0.0
    %126 = vmatpush1.msra.mxu0 0.0
    %127 = vmatprep.subr.mxu0 0.0
    %128 = vmatpush1.msra.mxu0 0.0
    %129 = vmatprep.subr.mxu0 0.0
    %130 = vmatpush1.msra.mxu0 0.0
    %131 = vmatprep.subr.mxu0 0.0
    %132 = vmatpush1.msra.mxu0 0.0
    %133 = vmatprep.subr.mxu0 0.0
    %134 = vmatpush1.msra.mxu0 0.0
    %135 = vmatprep.subr.mxu0 0.0
    %136 = vmatpush1.msra.mxu0 0.0
    %137 = vmatprep.mubr.f32.mxu0 0.0
    %138 = vmatmul.mubr.f32.gmra.mrb[0].mxu0 %v72
    %v139 = vpop.f32.mrb[0].mxu0
    %v140 = vadd.f32 0.0, %v139
    %v141 = vpop.f32.mrb[0].mxu0
    %142 = vdwg.mxu0
    %v143 = vadd.f32 %v71, %v140
    %144 = vst [vmem:[#allocation2] sm:$0xff] %v143
    // Predicated region
    $region22: #{zero_output_forward.1} parent=1 // pred_check
      %p145 = pneg %p66
    $region23: #{zero_output_forward.1} parent=1 // pred_check_branch
      %147 = sbr.rel (%p145) target = $region25
    $region24: #{zero_output_forward.1} parent=1 // pred_region
      %v148 = vld [vmem:[#allocation2] sm:$0xff]
      %v149 = vmul.f32 %v148, 0.5
      %v150 = vld [vmem:[%s3] sm:$0x1]
      %v152 = vlaneseq
      %v153 = vshrl.u32 %v152, 7
      %v154 = vsub.s32 0, %v153
      %v155 = vrot.slane %v150, %v154
      %v157 = vadd.f32 %v149, %v155
      %158 = vst [vmem:[#allocation2] sm:$0xff] %v157
    $region25: #{zero_output_forward.1} parent=1 // pred_fallthru
      _
    // Predicated region
    $region26: #{zero_output_forward.1} parent=1 // pred_check
      _
    $region27: #{zero_output_forward.1} parent=1 // pred_check_branch
      %160 = sbr.rel (0) target = $region29
    $region28: #{zero_output_forward.1} parent=1 // pred_region
      %s162 = ssub.s32 128, 128
      %163 = vsyncadd [#allocation3], %s162
      %s165 = sshll.u32 [#allocation2], 4
      %s166 = int_to_ptr.vmem [resolvable:$true] %s165
      %168 = dma.vmem_to_hbm [thread:$0]  %s166, 128, %s4, [#allocation3]
    $region29: #{zero_output_forward.1} parent=1 // pred_fallthru
      _
    // Predicated region
    $region30: #{zero_output_forward.1} parent=1 // pred_check
      _
    $region31: #{zero_output_forward.1} parent=1 // pred_check_branch
      %170 = sbr.rel (0) target = $region33
    $region32: #{zero_output_forward.1} parent=1 // pred_region
      %171 = dma.done [#allocation3], 128
    $region33: #{zero_output_forward.1} parent=1 // pred_fallthru
      _
    %172 = vsyncpa [#allocation3], 1

</llo_original>
